<compile_context>
chip_gen: v7x
topology: tpu7x:2x2x1
jax: 0.10.0
libtpu: 0.0.40
codegen_flags: <defaults>
</compile_context>

<pallas_src>
import functools

import jax
import jax.numpy as jnp
from jax.experimental import pallas as pl
from jax.experimental.pallas import tpu as pltpu


def _round_up(x, m):
    return (x + m - 1) // m * m


def _sublane_quantum(dtype):
    # 32-bit dtypes tile 8 sublanes; bf16 packs 16; 8-bit packs 32.
    return max(8, (8 * 4) // jnp.dtype(dtype).itemsize)


def qnetwork_kernel(x_ref, w_ref, b_ref, o_ref, *, state_dim, w1_rows, hp, ap):
    """One batch tile of the 3-layer MLP.

    x_ref: (TB, state_dim)          f32 (cast to compute dtype in-vreg)
    w_ref: (w1_rows + 2*hp, LANE)   compute dtype, packed [W1; W2; W3], zero-padded
    b_ref: (8, LANE)                f32, rows 0/1/2 = b1/b2/b3, zero-padded
    o_ref: (TB, ap)                 lane-dense (ap is a multiple of 128)
    """
    cdt = w_ref.dtype

    # Tile-aligned, zero-cost views into the packed slabs (padded rows/cols are zeros).
    w1 = w_ref[0:w1_rows, 0:hp]                        # (w1_rows, Hp)
    w2 = w_ref[w1_rows:w1_rows + hp, 0:hp]             # (Hp, Hp)
    w3 = w_ref[w1_rows + hp:w1_rows + 2 * hp, 0:ap]    # (Hp, Ap)
    b1 = b_ref[0:1, 0:hp]
    b2 = b_ref[1:2, 0:hp]
    b3 = b_ref[2:3, 0:ap]

    # Cast activations to the matmul operand dtype IN-VREG (free; VPU slot has slack).
    x = x_ref[...].astype(cdt)
    if state_dim != w1_rows:
        # Zero-extend features to the aligned K of the W1 view (extra W1 rows are zero).
        x = jnp.concatenate(
            [x, jnp.zeros((x.shape[0], w1_rows - state_dim), cdt)], axis=1)

    # Layer 1: Linear + ReLU  (MXU matmul, f32 accumulation, f32 elementwise)
    h1 = jnp.dot(x, w1, preferred_element_type=jnp.float32)
    h1 = jnp.maximum(h1 + b1, 0.0)
    # Layer 2: Linear + ReLU
    h2 = jnp.dot(h1.astype(cdt), w2, preferred_element_type=jnp.float32)
    h2 = jnp.maximum(h2 + b2, 0.0)
    # Layer 3: Linear (no activation)
    out = jnp.dot(h2.astype(cdt), w3, preferred_element_type=jnp.float32)
    o_ref[...] = (out + b3).astype(o_ref.dtype)


def pack_qnetwork_params(params, *, compute_dtype=jnp.float32):
    """Pack w1,b1,w2,b2,w3,b3 into one weight slab + one bias slab (built once).

    Weights are stored as [in_features, out_features] (PyTorch W.T), so y = x @ W + b.
    Hidden / action output dims are zero-padded to 128 lanes; W1's row count is
    padded to the compute-dtype sublane quantum so all slab views are tile-aligned.
    """
    w1, b1 = params["w1"], params["b1"]
    w2, b2 = params["w2"], params["b2"]
    w3, b3 = params["w3"], params["b3"]
    s, h = w1.shape
    a = w3.shape[1]

    hp = _round_up(h, 128)
    ap = _round_up(a, 128)
    lane = max(hp, ap)
    w1_rows = _round_up(s, _sublane_quantum(compute_dtype))

    w_slab = jnp.zeros((w1_rows + 2 * hp, lane), compute_dtype)
    w_slab = w_slab.at[0:s, 0:h].set(w1.astype(compute_dtype))
    w_slab = w_slab.at[w1_rows:w1_rows + h, 0:h].set(w2.astype(compute_dtype))
    w_slab = w_slab.at[w1_rows + hp:w1_rows + hp + h, 0:a].set(w3.astype(compute_dtype))

    b_slab = jnp.zeros((8, lane), jnp.float32)
    b_slab = b_slab.at[0, 0:h].set(b1.reshape(-1).astype(jnp.float32))
    b_slab = b_slab.at[1, 0:h].set(b2.reshape(-1).astype(jnp.float32))
    b_slab = b_slab.at[2, 0:a].set(b3.reshape(-1).astype(jnp.float32))

    return {
        "w_slab": w_slab,
        "b_slab": b_slab,
        "dims": dict(state_dim=s, hidden_dim=h, action_dim=a,
                     w1_rows=w1_rows, hp=hp, ap=ap),
    }


def _choose_tiling(b, block_batch, sub, min_tiles):
    """Pick (tile_rows, padded_rows) for the batch axis.

    Prefers a tile that exactly divides round_up(b, sub) so the wrapper never
    has to jnp.pad the batch (a full HBM read+write). Falls back to a padded
    tail tile only when the best exact divisor would create too many grid
    steps (each step costs ~0.35 us of fixed overhead).
    """
    bp = _round_up(max(b, 1), sub)
    cap = min(_round_up(block_batch, sub), bp)
    if min_tiles > 1:
        cap = min(cap, _round_up(pl.cdiv(bp, min_tiles), sub))
    cap = max(cap, sub)
    best = sub
    for d in range(sub, cap + 1, sub):
        if bp % d == 0:
            best = d
    if 4 * best >= cap:            # exact divisor is big enough -> no batch padding
        return best, bp
    return cap, _round_up(b, cap)  # padded tail tile (pad is < one tile)


def qnetwork_forward(state, packed, *, block_batch=1024, out_dtype=jnp.float32,
                     min_tiles=None):
    """state: [B, state_dim] float32; packed: output of pack_qnetwork_params."""
    dims = packed["dims"]
    s, a = dims["state_dim"], dims["action_dim"]
    w1_rows, hp, ap = dims["w1_rows"], dims["hp"], dims["ap"]
    w_slab, b_slab = packed["w_slab"], packed["b_slab"]

    b = state.shape[0]
    # x is streamed in f32 (sublane quantum 8); the output block's quantum may be 16 (bf16).
    sub = max(8, _sublane_quantum(out_dtype))
    if min_tiles is None:
        # >=2 batch tiles for large batches so the "parallel" axis can use both
        # v7x TensorCores; single tile for small/latency-critical batches.
        min_tiles = 2 if b >= 256 else 1
    tb, bp = _choose_tiling(b, block_batch, sub, min_tiles)

    x = state.astype(jnp.float32)  # stays f32 in HBM; compute-dtype cast happens in-kernel
    if bp != b:
        # Only reached when no reasonable exact-divisor tiling exists (pad < one tile).
        x = jnp.pad(x, ((0, bp - b), (0, 0)))

    kernel = functools.partial(qnetwork_kernel, state_dim=s, w1_rows=w1_rows, hp=hp, ap=ap)
    out = pl.pallas_call(
        kernel,
        out_shape=jax.ShapeDtypeStruct((bp, ap), out_dtype),
        grid=(bp // tb,),
        in_specs=[
            pl.BlockSpec((tb, s), lambda i: (i, 0)),        # streamed f32 state tile
            pl.BlockSpec(w_slab.shape, lambda i: (0, 0)),   # grid-invariant weight slab
            pl.BlockSpec(b_slab.shape, lambda i: (0, 0)),   # grid-invariant bias slab
        ],
        out_specs=pl.BlockSpec((tb, ap), lambda i: (i, 0)),  # lane-dense (128-wide) output
        compiler_params=pltpu.CompilerParams(dimension_semantics=("parallel",)),
    )(x, w_slab, b_slab)
    return out[:b, :a]


def init_qnetwork_params(key, state_dim, action_dim, hidden_dim):
    """Deterministic init matching nn.Linear's default U(-1/sqrt(fan_in), 1/sqrt(fan_in))."""
    keys = jax.random.split(key, 6)

    def linear(kw, kb, fan_in, fan_out):
        bound = 1.0 / jnp.sqrt(jnp.float32(fan_in))
        w = jax.random.uniform(kw, (fan_in, fan_out), jnp.float32, -bound, bound)
        b = jax.random.uniform(kb, (1, fan_out), jnp.float32, -bound, bound)
        return w, b

    w1, b1 = linear(keys[0], keys[1], state_dim, hidden_dim)
    w2, b2 = linear(keys[2], keys[3], hidden_dim, hidden_dim)
    w3, b3 = linear(keys[4], keys[5], hidden_dim, action_dim)
    return {"w1": w1, "b1": b1, "w2": w2, "b2": b2, "w3": w3, "b3": b3}


def qnetwork_ref(state, params):
    h1 = jnp.maximum(state @ params["w1"] + params["b1"], 0.0)
    h2 = jnp.maximum(h1 @ params["w2"] + params["b2"], 0.0)
    return h2 @ params["w3"] + params["b3"]


if __name__ == "__main__":
    key = jax.random.PRNGKey(0)
    k_param, k_state, k_state2, k_state3 = jax.random.split(key, 4)

    batch = 8
    state_dim = 16
    hidden_dim = 32
    action_dim = 4

    params = init_qnetwork_params(k_param, state_dim, action_dim, hidden_dim)
    state = jax.random.normal(k_state, (batch, state_dim), jnp.float32)
    ref = qnetwork_ref(state, params)

    # 1) f32 path (exact nn.Linear semantics)
    packed = pack_qnetwork_params(params)
    out = jax.block_until_ready(qnetwork_forward(state, packed))
    assert out.shape == (batch, action_dim)
    assert jnp.allclose(out, ref, atol=1e-5, rtol=1e-5)

    # 2) bf16 matmul operands (v6e/v7x MXU fast path); activations are cast to bf16
    #    in-vreg inside the kernel, accumulation / bias / ReLU stay f32.
    packed_bf16 = pack_qnetwork_params(params, compute_dtype=jnp.bfloat16)
    out_bf16 = jax.block_until_ready(qnetwork_forward(state, packed_bf16))
    assert out_bf16.shape == (batch, action_dim)
    assert jnp.allclose(out_bf16, ref, atol=5e-2, rtol=5e-2)

    # 3) multi-tile batch path: exact-divisor tiling (b=40, tile=8 -> 5 tiles, no pad)
    state2 = jax.random.normal(k_state2, (40, state_dim), jnp.float32)
    out2 = jax.block_until_ready(qnetwork_forward(state2, packed, block_batch=16))
    assert jnp.allclose(out2, qnetwork_ref(state2, params), atol=1e-5, rtol=1e-5)

    # 4) bf16 weights + bf16 output writeback (halves output HBM bytes), single tile
    state3 = jax.random.normal(k_state3, (32, state_dim), jnp.float32)
    out3 = jax.block_until_ready(
        qnetwork_forward(state3, packed_bf16, out_dtype=jnp.bfloat16))
    assert out3.shape == (32, action_dim)
    assert jnp.allclose(out3.astype(jnp.float32), qnetwork_ref(state3, params),
                        atol=1e-1, rtol=1e-1)

    print("KERNEL_OK")
</pallas_src>

<mosaic_0001>
module attributes {stable_mosaic.version = 11 : i64} {
  func.func @qnetwork_kernel(%arg0: i32, %arg1: memref<8x16xf32, #tpu.memory_space<vmem>>, %arg2: memref<272x128xf32, #tpu.memory_space<vmem>>, %arg3: memref<8x128xf32, #tpu.memory_space<vmem>>, %arg4: memref<8x128xf32, #tpu.memory_space<vmem>>) attributes {dimension_semantics = [#tpu.dimension_semantics<parallel>], iteration_bounds = array<i64: 1>, scalar_prefetch = 0 : i64, scratch_operands = 0 : i64, tpu.core_type = #tpu.core_type<tc>, window_params = [{transform_indices = @transform_0, window_bounds = array<i64: 8, 16>}, {pipeline_mode = #tpu.pipeline_mode<synchronous>, transform_indices = @transform_1, window_bounds = array<i64: 272, 128>}, {pipeline_mode = #tpu.pipeline_mode<synchronous>, transform_indices = @transform_2, window_bounds = array<i64: 8, 128>}, {transform_indices = @transform_3, window_bounds = array<i64: 8, 128>}]} {
    %c0 = arith.constant 0 : index
    %c0_0 = arith.constant 0 : index
    %0 = vector.load %arg2[%c0, %c0_0] : memref<272x128xf32, #tpu.memory_space<vmem>>, vector<16x128xf32>
    %c16 = arith.constant 16 : index
    %c0_1 = arith.constant 0 : index
    %1 = vector.load %arg2[%c16, %c0_1] : memref<272x128xf32, #tpu.memory_space<vmem>>, vector<128x128xf32>
    %c144 = arith.constant 144 : index
    %c0_2 = arith.constant 0 : index
    %2 = vector.load %arg2[%c144, %c0_2] : memref<272x128xf32, #tpu.memory_space<vmem>>, vector<128x128xf32>
    %c0_3 = arith.constant 0 : index
    %c0_4 = arith.constant 0 : index
    %3 = vector.load %arg3[%c0_3, %c0_4] : memref<8x128xf32, #tpu.memory_space<vmem>>, vector<1x128xf32>
    %c1 = arith.constant 1 : index
    %c0_5 = arith.constant 0 : index
    %4 = vector.load %arg3[%c1, %c0_5] : memref<8x128xf32, #tpu.memory_space<vmem>>, vector<1x128xf32>
    %c2 = arith.constant 2 : index
    %c0_6 = arith.constant 0 : index
    %5 = vector.load %arg3[%c2, %c0_6] : memref<8x128xf32, #tpu.memory_space<vmem>>, vector<1x128xf32>
    %c0_7 = arith.constant 0 : index
    %c0_8 = arith.constant 0 : index
    %6 = vector.load %arg1[%c0_7, %c0_8] : memref<8x16xf32, #tpu.memory_space<vmem>>, vector<8x16xf32>
    %cst = arith.constant dense<0.000000e+00> : vector<8x128xf32>
    %7 = tpu.matmul %6, %0, %cst {dimension_numbers = #tpu.dot_dimension_numbers<[1], [0], [0], [1], [0, 0, 1, 1], [], []>} : vector<8x16xf32>, vector<16x128xf32>, vector<8x128xf32> -> vector<8x128xf32>
    %8 = vector.broadcast %3 : vector<1x128xf32> to vector<8x128xf32>
    %9 = arith.addf %7, %8 : vector<8x128xf32>
    %cst_9 = arith.constant 0.000000e+00 : f32
    %10 = vector.broadcast %cst_9 : f32 to vector<8x128xf32>
    %11 = arith.maximumf %9, %10 : vector<8x128xf32>
    %cst_10 = arith.constant dense<0.000000e+00> : vector<8x128xf32>
    %12 = tpu.matmul %11, %1, %cst_10 {dimension_numbers = #tpu.dot_dimension_numbers<[1], [0], [0], [1], [0, 0, 1, 1], [], []>} : vector<8x128xf32>, vector<128x128xf32>, vector<8x128xf32> -> vector<8x128xf32>
    %13 = vector.broadcast %4 : vector<1x128xf32> to vector<8x128xf32>
    %14 = arith.addf %12, %13 : vector<8x128xf32>
    %cst_11 = arith.constant 0.000000e+00 : f32
    %15 = vector.broadcast %cst_11 : f32 to vector<8x128xf32>
    %16 = arith.maximumf %14, %15 : vector<8x128xf32>
    %cst_12 = arith.constant dense<0.000000e+00> : vector<8x128xf32>
    %17 = tpu.matmul %16, %2, %cst_12 {dimension_numbers = #tpu.dot_dimension_numbers<[1], [0], [0], [1], [0, 0, 1, 1], [], []>} : vector<8x128xf32>, vector<128x128xf32>, vector<8x128xf32> -> vector<8x128xf32>
    %18 = vector.broadcast %5 : vector<1x128xf32> to vector<8x128xf32>
    %19 = arith.addf %17, %18 : vector<8x128xf32>
    %c0_13 = arith.constant 0 : index
    %c0_14 = arith.constant 0 : index
    %20 = vector.load %arg4[%c0_13, %c0_14] : memref<8x128xf32, #tpu.memory_space<vmem>>, vector<8x128xf32>
    tpu.vector_store %arg4[%c0_13, %c0_14], %19 {strides = array<i32>} : memref<8x128xf32, #tpu.memory_space<vmem>>, vector<8x128xf32>,
    return
  }
  func.func @transform_0(%arg0: i32) -> (i32, i32) {
    %c0_i32 = arith.constant 0 : i32
    %c0_i32_0 = arith.constant 0 : i32
    return %arg0, %c0_i32 : i32, i32
  }
  func.func @transform_1(%arg0: i32) -> (i32, i32) {
    %c0_i32 = arith.constant 0 : i32
    %c0_i32_0 = arith.constant 0 : i32
    %c0_i32_1 = arith.constant 0 : i32
    return %c0_i32, %c0_i32_0 : i32, i32
  }
  func.func @transform_2(%arg0: i32) -> (i32, i32) {
    %c0_i32 = arith.constant 0 : i32
    %c0_i32_0 = arith.constant 0 : i32
    %c0_i32_1 = arith.constant 0 : i32
    return %c0_i32, %c0_i32_0 : i32, i32
  }
  func.func @transform_3(%arg0: i32) -> (i32, i32) {
    %c0_i32 = arith.constant 0 : i32
    %c0_i32_0 = arith.constant 0 : i32
    return %arg0, %c0_i32 : i32, i32
  }
}

</mosaic_0001>

<llo_original>
// kernel: tpu_custom_call.1
$region0: #{tpu_custom_call.1}
  #allocation0 [shape = 'u32[]', space=smem, size = 0x4, offset = 0x4, fixed_abs, tag = 'smem constant byte address 0x4 - core index']
  #allocation1 [shape = 'u32[144,128]{1,0:T(1,128)}', space=vmem, size = 0x12000, scoped, tag = 'internal scratch']
  %s0 = inlined_call_operand.hbm [shape: f32[8,16], index: 0, kind: input, shape index: {}]
  %s1 = inlined_call_operand.hbm [shape: f32[272,128], index: 1, kind: input, shape index: {}]
  %s2 = inlined_call_operand.hbm [shape: f32[8,128], index: 2, kind: input, shape index: {}]
  %s3 = inlined_call_operand.hbm [shape: f32[8,128], index: 3, kind: output, shape index: {}]
  %s4 = sld [smem:[#allocation0]]
  $region34: #{tpu_custom_call.1} parent=0
    _
  %s6 = ssub.s32 1, %s4
  %s7 = scalar_select 0, %s6, %s4
  $region1: #{tpu_custom_call.1} parent=0
    #allocation2 [shape = 'u8[4096]{0}', space=vmem, size = 0x1000, scoped, tag = 'input window, operand 0, single buffered']
    #allocation3 [shape = 's32[1]{0}', space=sflag, size = 0x4, scoped, tag = 'scoped memory for tpu_custom_call.1']
    #allocation4 [shape = 's32[1]{0}', space=sflag, size = 0x4, scoped, tag = 'scoped memory for tpu_custom_call.1']
    #allocation5 [shape = 'u8[139264]{0}', space=vmem, size = 0x22000, scoped, tag = 'input window, operand 1, single buffered']
    #allocation6 [shape = 's32[1]{0}', space=sflag, size = 0x4, scoped, tag = 'scoped memory for tpu_custom_call.1']
    #allocation7 [shape = 'u8[4096]{0}', space=vmem, size = 0x1000, scoped, tag = 'input window, operand 2, single buffered']
    #allocation8 [shape = 'u8[4096]{0}', space=vmem, size = 0x1000, scoped, tag = 'output window, operand 0, single buffered']
    %8 = vsyncpa [#allocation3], 0
    %9 = vsyncpa [#allocation6], 0
    %10 = vsyncpa [#allocation4], 0
    // Predicated region
    $region2: #{tpu_custom_call.1} parent=1 // pred_check
      _
    $region3: #{tpu_custom_call.1} parent=1 // pred_check_branch
      %12 = sbr.rel (0) target = $region5
    $region4: #{tpu_custom_call.1} parent=1 // pred_region
      %s14 = ssub.s32 128, 128
      %15 = vsyncadd [#allocation3], %s14
      %s17 = sshll.u32 [#allocation2], 4
      %s18 = int_to_ptr.vmem [resolvable:$true] %s17
      %20 = dma.hbm_to_vmem [thread:$0]  %s0, 128, %s18, [#allocation3]
    $region5: #{tpu_custom_call.1} parent=1 // pred_fallthru
      _
    // Predicated region
    $region6: #{tpu_custom_call.1} parent=1 // pred_check
      _
    $region7: #{tpu_custom_call.1} parent=1 // pred_check_branch
      %22 = sbr.rel (0) target = $region9
    $region8: #{tpu_custom_call.1} parent=1 // pred_region
      %s24 = ssub.s32 4352, 4352
      %25 = vsyncadd [#allocation6], %s24
      %s26 = sshll.u32 [#allocation5], 4
      %s27 = int_to_ptr.vmem [resolvable:$true] %s26
      %32 = dma.hbm_to_vmem [thread:$0]  %s1, 4352, %s27, [#allocation6], 128, 128, 8
    $region9: #{tpu_custom_call.1} parent=1 // pred_fallthru
      _
    // Predicated region
    $region10: #{tpu_custom_call.1} parent=1 // pred_check
      _
    $region11: #{tpu_custom_call.1} parent=1 // pred_check_branch
      %34 = sbr.rel (0) target = $region13
    $region12: #{tpu_custom_call.1} parent=1 // pred_region
      %s36 = ssub.s32 128, 128
      %37 = vsyncadd [#allocation6], %s36
      %s39 = sshll.u32 [#allocation7], 4
      %s40 = int_to_ptr.vmem [resolvable:$true] %s39
      %42 = dma.hbm_to_vmem [thread:$0]  %s2, 128, %s40, [#allocation6]
    $region13: #{tpu_custom_call.1} parent=1 // pred_fallthru
      _
    // Predicated region
    $region14: #{tpu_custom_call.1} parent=1 // pred_check
      _
    $region15: #{tpu_custom_call.1} parent=1 // pred_check_branch
      %44 = sbr.rel (0) target = $region17
    $region16: #{tpu_custom_call.1} parent=1 // pred_region
      %45 = dma.done [#allocation3], 128
    $region17: #{tpu_custom_call.1} parent=1 // pred_fallthru
      _
    // Predicated region
    $region18: #{tpu_custom_call.1} parent=1 // pred_check
      _
    $region19: #{tpu_custom_call.1} parent=1 // pred_check_branch
      %47 = sbr.rel (0) target = $region21
    $region20: #{tpu_custom_call.1} parent=1 // pred_region
      %48 = dma.done [#allocation6], 4352
    $region21: #{tpu_custom_call.1} parent=1 // pred_fallthru
      _
    // Predicated region
    $region22: #{tpu_custom_call.1} parent=1 // pred_check
      _
    $region23: #{tpu_custom_call.1} parent=1 // pred_check_branch
      %50 = sbr.rel (0) target = $region25
    $region24: #{tpu_custom_call.1} parent=1 // pred_region
      %51 = dma.done [#allocation6], 128
    $region25: #{tpu_custom_call.1} parent=1 // pred_fallthru
      _
    %v52 = vld [vmem:[#allocation5] sm:$0xff]
    %v53 = vld [vmem:[#allocation5 + $0x8] sm:$0xff]
    %v54 = vld [vmem:[#allocation5 + $0x10] sm:$0xff]
    %v55 = vld [vmem:[#allocation5 + $0x18] sm:$0xff]
    %v56 = vld [vmem:[#allocation5 + $0x20] sm:$0xff]
    %v57 = vld [vmem:[#allocation5 + $0x28] sm:$0xff]
    %v58 = vld [vmem:[#allocation5 + $0x30] sm:$0xff]
    %v59 = vld [vmem:[#allocation5 + $0x38] sm:$0xff]
    %v60 = vld [vmem:[#allocation5 + $0x40] sm:$0xff]
    %v61 = vld [vmem:[#allocation5 + $0x48] sm:$0xff]
    %v62 = vld [vmem:[#allocation5 + $0x50] sm:$0xff]
    %v63 = vld [vmem:[#allocation5 + $0x58] sm:$0xff]
    %v64 = vld [vmem:[#allocation5 + $0x60] sm:$0xff]
    %v65 = vld [vmem:[#allocation5 + $0x68] sm:$0xff]
    %v66 = vld [vmem:[#allocation5 + $0x70] sm:$0xff]
    %v67 = vld [vmem:[#allocation5 + $0x78] sm:$0xff]
    %v68 = vld [vmem:[#allocation5 + $0x80] sm:$0xff]
    %v69 = vld [vmem:[#allocation5 + $0x88] sm:$0xff]
    %v70 = vld [vmem:[#allocation5 + $0x90] sm:$0xff]
    %v71 = vld [vmem:[#allocation5 + $0x98] sm:$0xff]
    %v72 = vld [vmem:[#allocation5 + $0xa0] sm:$0xff]
    %v73 = vld [vmem:[#allocation5 + $0xa8] sm:$0xff]
    %v74 = vld [vmem:[#allocation5 + $0xb0] sm:$0xff]
    %v75 = vld [vmem:[#allocation5 + $0xb8] sm:$0xff]
    %v76 = vld [vmem:[#allocation5 + $0xc0] sm:$0xff]
    %v77 = vld [vmem:[#allocation5 + $0xc8] sm:$0xff]
    %v78 = vld [vmem:[#allocation5 + $0xd0] sm:$0xff]
    %v79 = vld [vmem:[#allocation5 + $0xd8] sm:$0xff]
    %v80 = vld [vmem:[#allocation5 + $0xe0] sm:$0xff]
    %v81 = vld [vmem:[#allocation5 + $0xe8] sm:$0xff]
    %v82 = vld [vmem:[#allocation5 + $0xf0] sm:$0xff]
    %v83 = vld [vmem:[#allocation5 + $0xf8] sm:$0xff]
    %v84 = vld [vmem:[#allocation5 + $0x100] sm:$0xff]
    %v85 = vld [vmem:[#allocation5 + $0x108] sm:$0xff]
    %v86 = vld [vmem:[#allocation7] sm:$0x1]
    %v87 = vld [vmem:[#allocation7 + $0x1] sm:$0x1]
    %v88 = vld [vmem:[#allocation7 + $0x2] sm:$0x1]
    %v89 = vld [vmem:[#allocation2] sm:$0xff]
    %v90 = vlaneseq
    %v91 = vshrl.u32 %v90, 7
    %v92 = vsub.s32 0, %v91
    %v93 = vrot.slane %v86, %v92
    %vm94 = vcmask 130048
    %v96 = vsel %vm94, %v89, 0
    %98 = vmatprep.subr.mxu0 0.0
    %99 = vmatpush1.msra.mxu0 %v52
    %100 = vmatprep.subr.mxu0 0.0
    %101 = vmatpush1.msra.mxu0 %v53
    %102 = vmatprep.subr.mxu0 0.0
    %103 = vmatpush1.msra.mxu0 0.0
    %104 = vmatprep.subr.mxu0 0.0
    %105 = vmatpush1.msra.mxu0 0.0
    %106 = vmatprep.subr.mxu0 0.0
    %107 = vmatpush1.msra.mxu0 0.0
    %108 = vmatprep.subr.mxu0 0.0
    %109 = vmatpush1.msra.mxu0 0.0
    %110 = vmatprep.subr.mxu0 0.0
    %111 = vmatpush1.msra.mxu0 0.0
    %112 = vmatprep.subr.mxu0 0.0
    %113 = vmatpush1.msra.mxu0 0.0
    %114 = vmatprep.subr.mxu0 0.0
    %115 = vmatpush1.msra.mxu0 0.0
    %116 = vmatprep.subr.mxu0 0.0
    %117 = vmatpush1.msra.mxu0 0.0
    %118 = vmatprep.subr.mxu0 0.0
    %119 = vmatpush1.msra.mxu0 0.0
    %120 = vmatprep.subr.mxu0 0.0
    %121 = vmatpush1.msra.mxu0 0.0
    %122 = vmatprep.subr.mxu0 0.0
    %123 = vmatpush1.msra.mxu0 0.0
    %124 = vmatprep.subr.mxu0 0.0
    %125 = vmatpush1.msra.mxu0 0.0
    %126 = vmatprep.subr.mxu0 0.0
    %127 = vmatpush1.msra.mxu0 0.0
    %128 = vmatprep.subr.mxu0 0.0
    %129 = vmatpush1.msra.mxu0 0.0
    %130 = vmatprep.subr.mxu0 0.0
    %131 = vmatpush1.msra.mxu0 0.0
    %132 = vmatprep.subr.mxu0 0.0
    %133 = vmatpush1.msra.mxu0 0.0
    %134 = vmatprep.subr.mxu0 0.0
    %135 = vmatpush1.msra.mxu0 0.0
    %136 = vmatprep.subr.mxu0 0.0
    %137 = vmatpush1.msra.mxu0 0.0
    %138 = vmatprep.subr.mxu0 0.0
    %139 = vmatpush1.msra.mxu0 0.0
    %140 = vmatprep.subr.mxu0 0.0
    %141 = vmatpush1.msra.mxu0 0.0
    %142 = vmatprep.subr.mxu0 0.0
    %143 = vmatpush1.msra.mxu0 0.0
    %144 = vmatprep.subr.mxu0 0.0
    %145 = vmatpush1.msra.mxu0 0.0
    %146 = vmatprep.subr.mxu0 0.0
    %147 = vmatpush1.msra.mxu0 0.0
    %148 = vmatprep.subr.mxu0 0.0
    %149 = vmatpush1.msra.mxu0 0.0
    %150 = vmatprep.subr.mxu0 0.0
    %151 = vmatpush1.msra.mxu0 0.0
    %152 = vmatprep.subr.mxu0 0.0
    %153 = vmatpush1.msra.mxu0 0.0
    %154 = vmatprep.subr.mxu0 0.0
    %155 = vmatpush1.msra.mxu0 0.0
    %156 = vmatprep.subr.mxu0 0.0
    %157 = vmatpush1.msra.mxu0 0.0
    %158 = vmatprep.subr.mxu0 0.0
    %159 = vmatpush1.msra.mxu0 0.0
    %160 = vmatprep.subr.mxu0 0.0
    %161 = vmatpush1.msra.mxu0 0.0
    %162 = vmatprep.mubr.f32.mxu0 0.0
    %163 = vmatmul.mubr.f32.gmra.mrb[0].mxu0 %v96
    %v164 = vpop.f32.mrb[0].mxu0
    %v165 = vadd.f32 %v93, %v164
    %v166 = vpop.f32.mrb[0].mxu0
    %167 = vdwg.mxu0
    %v168 = vmax.f32 %v165, 0.0
    %v169 = vlaneseq
    %v170 = vshrl.u32 %v169, 7
    %v171 = vsub.s32 0, %v170
    %v172 = vrot.slane %v87, %v171
    %173 = vmatprep.subr.mxu0 0.0
    %174 = vmatpush1.msra.mxu0 %v54
    %175 = vmatprep.subr.mxu0 0.0
    %176 = vmatpush1.msra.mxu0 %v55
    %177 = vmatprep.subr.mxu0 0.0
    %178 = vmatpush1.msra.mxu0 %v56
    %179 = vmatprep.subr.mxu0 0.0
    %180 = vmatpush1.msra.mxu0 %v57
    %181 = vmatprep.subr.mxu0 0.0
    %182 = vmatpush1.msra.mxu0 %v58
    %183 = vmatprep.subr.mxu0 0.0
    %184 = vmatpush1.msra.mxu0 %v59
    %185 = vmatprep.subr.mxu0 0.0
    %186 = vmatpush1.msra.mxu0 %v60
    %187 = vmatprep.subr.mxu0 0.0
    %188 = vmatpush1.msra.mxu0 %v61
    %189 = vmatprep.subr.mxu0 0.0
    %190 = vmatpush1.msra.mxu0 %v62
    %191 = vmatprep.subr.mxu0 0.0
    %192 = vmatpush1.msra.mxu0 %v63
    %193 = vmatprep.subr.mxu0 0.0
    %194 = vmatpush1.msra.mxu0 %v64
    %195 = vmatprep.subr.mxu0 0.0
    %196 = vmatpush1.msra.mxu0 %v65
    %197 = vmatprep.subr.mxu0 0.0
    %198 = vmatpush1.msra.mxu0 %v66
    %199 = vmatprep.subr.mxu0 0.0
    %200 = vmatpush1.msra.mxu0 %v67
    %201 = vmatprep.subr.mxu0 0.0
    %202 = vmatpush1.msra.mxu0 %v68
    %203 = vmatprep.subr.mxu0 0.0
    %204 = vmatpush1.msra.mxu0 %v69
    %205 = vmatprep.subr.mxu0 0.0
    %206 = vmatpush1.msra.mxu0 0.0
    %207 = vmatprep.subr.mxu0 0.0
    %208 = vmatpush1.msra.mxu0 0.0
    %209 = vmatprep.subr.mxu0 0.0
    %210 = vmatpush1.msra.mxu0 0.0
    %211 = vmatprep.subr.mxu0 0.0
    %212 = vmatpush1.msra.mxu0 0.0
    %213 = vmatprep.subr.mxu0 0.0
    %214 = vmatpush1.msra.mxu0 0.0
    %215 = vmatprep.subr.mxu0 0.0
    %216 = vmatpush1.msra.mxu0 0.0
    %217 = vmatprep.subr.mxu0 0.0
    %218 = vmatpush1.msra.mxu0 0.0
    %219 = vmatprep.subr.mxu0 0.0
    %220 = vmatpush1.msra.mxu0 0.0
    %221 = vmatprep.subr.mxu0 0.0
    %222 = vmatpush1.msra.mxu0 0.0
    %223 = vmatprep.subr.mxu0 0.0
    %224 = vmatpush1.msra.mxu0 0.0
    %225 = vmatprep.subr.mxu0 0.0
    %226 = vmatpush1.msra.mxu0 0.0
    %227 = vmatprep.subr.mxu0 0.0
    %228 = vmatpush1.msra.mxu0 0.0
    %229 = vmatprep.subr.mxu0 0.0
    %230 = vmatpush1.msra.mxu0 0.0
    %231 = vmatprep.subr.mxu0 0.0
    %232 = vmatpush1.msra.mxu0 0.0
    %233 = vmatprep.subr.mxu0 0.0
    %234 = vmatpush1.msra.mxu0 0.0
    %235 = vmatprep.subr.mxu0 0.0
    %236 = vmatpush1.msra.mxu0 0.0
    %237 = vmatprep.mubr.f32.mxu0 0.0
    %238 = vmatmul.mubr.f32.gmra.mrb[0].mxu0 %v168
    %v239 = vpop.f32.mrb[0].mxu0
    %v240 = vadd.f32 %v172, %v239
    %v241 = vpop.f32.mrb[0].mxu0
    %242 = vdwg.mxu0
    %v243 = vmax.f32 %v240, 0.0
    %v244 = vlaneseq
    %v245 = vshrl.u32 %v244, 7
    %v246 = vsub.s32 0, %v245
    %v247 = vrot.slane %v88, %v246
    %248 = vmatprep.subr.mxu0 0.0
    %249 = vmatpush1.msra.mxu0 %v70
    %250 = vmatprep.subr.mxu0 0.0
    %251 = vmatpush1.msra.mxu0 %v71
    %252 = vmatprep.subr.mxu0 0.0
    %253 = vmatpush1.msra.mxu0 %v72
    %254 = vmatprep.subr.mxu0 0.0
    %255 = vmatpush1.msra.mxu0 %v73
    %256 = vmatprep.subr.mxu0 0.0
    %257 = vmatpush1.msra.mxu0 %v74
    %258 = vmatprep.subr.mxu0 0.0
    %259 = vmatpush1.msra.mxu0 %v75
    %260 = vmatprep.subr.mxu0 0.0
    %261 = vmatpush1.msra.mxu0 %v76
    %262 = vmatprep.subr.mxu0 0.0
    %263 = vmatpush1.msra.mxu0 %v77
    %264 = vmatprep.subr.mxu0 0.0
    %265 = vmatpush1.msra.mxu0 %v78
    %266 = vmatprep.subr.mxu0 0.0
    %267 = vmatpush1.msra.mxu0 %v79
    %268 = vmatprep.subr.mxu0 0.0
    %269 = vmatpush1.msra.mxu0 %v80
    %270 = vmatprep.subr.mxu0 0.0
    %271 = vmatpush1.msra.mxu0 %v81
    %272 = vmatprep.subr.mxu0 0.0
    %273 = vmatpush1.msra.mxu0 %v82
    %274 = vmatprep.subr.mxu0 0.0
    %275 = vmatpush1.msra.mxu0 %v83
    %276 = vmatprep.subr.mxu0 0.0
    %277 = vmatpush1.msra.mxu0 %v84
    %278 = vmatprep.subr.mxu0 0.0
    %279 = vmatpush1.msra.mxu0 %v85
    %280 = vmatprep.subr.mxu0 0.0
    %281 = vmatpush1.msra.mxu0 0.0
    %282 = vmatprep.subr.mxu0 0.0
    %283 = vmatpush1.msra.mxu0 0.0
    %284 = vmatprep.subr.mxu0 0.0
    %285 = vmatpush1.msra.mxu0 0.0
    %286 = vmatprep.subr.mxu0 0.0
    %287 = vmatpush1.msra.mxu0 0.0
    %288 = vmatprep.subr.mxu0 0.0
    %289 = vmatpush1.msra.mxu0 0.0
    %290 = vmatprep.subr.mxu0 0.0
    %291 = vmatpush1.msra.mxu0 0.0
    %292 = vmatprep.subr.mxu0 0.0
    %293 = vmatpush1.msra.mxu0 0.0
    %294 = vmatprep.subr.mxu0 0.0
    %295 = vmatpush1.msra.mxu0 0.0
    %296 = vmatprep.subr.mxu0 0.0
    %297 = vmatpush1.msra.mxu0 0.0
    %298 = vmatprep.subr.mxu0 0.0
    %299 = vmatpush1.msra.mxu0 0.0
    %300 = vmatprep.subr.mxu0 0.0
    %301 = vmatpush1.msra.mxu0 0.0
    %302 = vmatprep.subr.mxu0 0.0
    %303 = vmatpush1.msra.mxu0 0.0
    %304 = vmatprep.subr.mxu0 0.0
    %305 = vmatpush1.msra.mxu0 0.0
    %306 = vmatprep.subr.mxu0 0.0
    %307 = vmatpush1.msra.mxu0 0.0
    %308 = vmatprep.subr.mxu0 0.0
    %309 = vmatpush1.msra.mxu0 0.0
    %310 = vmatprep.subr.mxu0 0.0
    %311 = vmatpush1.msra.mxu0 0.0
    %312 = vmatprep.mubr.f32.mxu0 0.0
    %313 = vmatmul.mubr.f32.gmra.mrb[0].mxu0 %v243
    %v314 = vpop.f32.mrb[0].mxu0
    %v315 = vadd.f32 %v247, %v314
    %v316 = vpop.f32.mrb[0].mxu0
    %317 = vdwg.mxu0
    %318 = vst [vmem:[#allocation8] sm:$0xff] %v315
    // Predicated region
    $region26: #{tpu_custom_call.1} parent=1 // pred_check
      _
    $region27: #{tpu_custom_call.1} parent=1 // pred_check_branch
      %320 = sbr.rel (0) target = $region29
    $region28: #{tpu_custom_call.1} parent=1 // pred_region
      %s322 = ssub.s32 128, 128
      %323 = vsyncadd [#allocation4], %s322
      %s325 = sshll.u32 [#allocation8], 4
      %s326 = int_to_ptr.vmem [resolvable:$true] %s325
      %328 = dma.vmem_to_hbm [thread:$0]  %s326, 128, %s3, [#allocation4]
    $region29: #{tpu_custom_call.1} parent=1 // pred_fallthru
      _
    // Predicated region
    $region30: #{tpu_custom_call.1} parent=1 // pred_check
      _
    $region31: #{tpu_custom_call.1} parent=1 // pred_check_branch
      %330 = sbr.rel (0) target = $region33
    $region32: #{tpu_custom_call.1} parent=1 // pred_region
      %331 = dma.done [#allocation4], 128
    $region33: #{tpu_custom_call.1} parent=1 // pred_fallthru
      _
    %332 = vsyncpa [#allocation3], 1
    %333 = vsyncpa [#allocation6], 1
    %334 = vsyncpa [#allocation4], 1

</llo_original>
